<compile_context>
chip_gen: v7x
topology: tpu7x:2x2x1
jax: 0.10.0
libtpu: 0.0.40
codegen_flags: <defaults>
</compile_context>

<pallas_src>
import functools
import math

import jax
import jax.numpy as jnp
from jax.experimental import pallas as pl
from jax.experimental.pallas import tpu as pltpu


def _eca_kernel(taps_ref, x_ref, o_ref, acc_ref, *, hw_tile, k, pad, n_channels):
    # taps_ref: (k,) f32 in SMEM    conv taps with the 1/(H*W) fold applied
    # x_ref:    (Nb, C, hw_tile)    one spatial tile of Nb batch elements
    # o_ref:    (Nb, 1, C)          sigmoid channel-attention weights (lane-dense)
    # acc_ref:  (Nb, C, 128) f32    lane-wise running spatial partial sums
    t = pl.program_id(1)

    @pl.when(t == 0)
    def _init():
        acc_ref[...] = jnp.zeros_like(acc_ref)

    # --- hot loop: pure VPU 128-lane chunk adds (no per-step XLU reduce) ---
    x = x_ref[...].astype(jnp.float32)
    part = acc_ref[...]
    for j in range(hw_tile // 128):
        part = part + x[:, :, j * 128:(j + 1) * 128]
    acc_ref[...] = part

    @pl.when(t == pl.num_programs(1) - 1)
    def _finish():
        # Single cross-lane reduce per batch block; result is (Nb, C) with the
        # channel axis lane-dense, which makes the roll-based conv natural.
        pooled = jnp.sum(acc_ref[...], axis=-1)                      # (Nb, C)
        lane = jax.lax.broadcasted_iota(jnp.int32, pooled.shape, 1)  # channel idx

        # 1-D channel conv (cross-correlation, zero padding):
        #   y[c] = sum_j taps[j] * pooled[c + j - pad]
        y = jnp.zeros_like(pooled)
        for j in range(k):
            d = j - pad
            if d == 0:
                shifted = pooled
            else:
                shifted = pltpu.roll(pooled, shift=(-d) % n_channels, axis=1)
            if d > 0:    # zero out positions that wrapped from the low end
                shifted = jnp.where(lane < n_channels - d, shifted, 0.0)
            elif d < 0:  # zero out positions that wrapped from the high end
                shifted = jnp.where(lane >= -d, shifted, 0.0)
            y = y + taps_ref[j] * shifted

        o_ref[...] = jax.nn.sigmoid(y)[:, None, :].astype(o_ref.dtype)


def _vmem_capacity_bytes():
    try:
        info = pltpu.get_tpu_info()
        cap = getattr(info, "vmem_capacity_bytes", None)
        if cap:
            return int(cap)
    except Exception:
        pass
    return 64 << 20  # conservative (v7x physical)


def _pick_tiles(n, c, hw, itemsize, x_budget, max_lane_tile=4096):
    """Choose (batch block Nb, spatial tile) so that 2 pipeline buffers of the
    (Nb, C, tile) x block fit in `x_budget`, the tile is a multiple of 128,
    the in-kernel unroll stays bounded, and >=2 batch blocks remain (v7x)."""
    hw128 = ((hw + 127) // 128) * 128
    per_lane = 2 * c * itemsize                      # nb = 1, double-buffered
    tile = max(128, (x_budget // per_lane) // 128 * 128)
    tile = min(tile, hw128, max_lane_tile)
    nb = 1
    if n > 1:
        for cand in range(n // 2, 0, -1):            # keep >= 2 batch blocks
            if n % cand == 0 and 2 * cand * c * tile * itemsize <= x_budget:
                nb = cand
                break
    return nb, tile


def efficient_channel_attention(x_nchw, conv1_weight):
    """ECA forward. x_nchw: (N, C, H, W); conv1_weight: (1, 1, k), no bias.
    Returns the channel-attention map of shape (N, C, 1, 1)."""
    N, C, H, W = x_nchw.shape
    k = int(conv1_weight.shape[-1])
    pad = k // 2
    HW = H * W
    itemsize = jnp.dtype(x_nchw.dtype).itemsize

    vmem_cap = _vmem_capacity_bytes()
    x_budget = min(vmem_cap // 4, 24 << 20)
    nb, hw_tile = _pick_tiles(N, C, HW, itemsize, x_budget)

    n_hw = -(-HW // hw_tile)            # cdiv
    hw_padded = n_hw * hw_tile

    # Free reshape (NCHW layout preserved); zero-pad HW only when it does not
    # tile evenly (zeros do not change the spatial sum).
    x_flat = x_nchw.reshape(N, C, HW)
    if hw_padded != HW:
        x_flat = jnp.pad(x_flat, ((0, 0), (0, 0), (0, hw_padded - HW)))

    # Raw conv taps with the average-pool normalization folded in (SMEM).
    taps = (conv1_weight.reshape(k).astype(jnp.float32)) * (1.0 / HW)

    acc_bytes = nb * C * 128 * 4
    x_bytes = 2 * nb * C * hw_tile * itemsize
    vmem_limit = int(min(vmem_cap, max(32 << 20, x_bytes + acc_bytes + (8 << 20))))

    kernel = functools.partial(_eca_kernel, hw_tile=hw_tile, k=k, pad=pad,
                               n_channels=C)

    out = pl.pallas_call(
        kernel,
        out_shape=jax.ShapeDtypeStruct((N, 1, C), x_nchw.dtype),
        grid_spec=pltpu.PrefetchScalarGridSpec(
            num_scalar_prefetch=0,
            grid=(N // nb, n_hw),
            in_specs=[
                pl.BlockSpec(memory_space=pltpu.MemorySpace.SMEM),       # taps
                pl.BlockSpec((nb, C, hw_tile), lambda b, t: (b, 0, t)),  # x
            ],
            out_specs=pl.BlockSpec((nb, 1, C), lambda b, t: (b, 0, 0)),
            scratch_shapes=[pltpu.VMEM((nb, C, 128), jnp.float32)],
        ),
        compiler_params=pltpu.CompilerParams(
            dimension_semantics=("parallel", "arbitrary"),
            vmem_limit_bytes=vmem_limit),
    )(taps, x_flat)

    return out.reshape(N, C, 1, 1)


if __name__ == "__main__":
    # Small shapes consistent with the module: batch=2, channels=16, spatial=16.
    # (channels=16 -> t = int((log2(16)+1)/2) = 2 -> k = 3, padding = 1.)
    N, C, H, W = 2, 16, 16, 16
    b, gamma = 1, 2
    t = int(abs((math.log(C, 2) + b) / gamma))
    k = t if t % 2 else t + 1
    pad = k // 2

    key = jax.random.PRNGKey(0)
    kx, kw = jax.random.split(key)
    x = jax.random.normal(kx, (N, C, H, W), dtype=jnp.float32)
    conv1_weight = jax.random.normal(kw, (1, 1, k), dtype=jnp.float32) * 0.5

    out = jax.block_until_ready(efficient_channel_attention(x, conv1_weight))

    # Pure-JAX reference: adaptive avg-pool(1) + Conv1d over channels + sigmoid.
    pooled = jnp.mean(x, axis=(2, 3))                                 # (N, C)
    conv = jax.lax.conv_general_dilated(
        pooled[:, None, :], conv1_weight,
        window_strides=(1,), padding=((pad, pad),),
        dimension_numbers=("NCH", "OIH", "NCH"))                      # (N, 1, C)
    ref = jax.nn.sigmoid(conv).reshape(N, C, 1, 1)

    assert out.shape == (N, C, 1, 1), out.shape
    assert jnp.allclose(out, ref, atol=1e-5, rtol=1e-5), \
        float(jnp.max(jnp.abs(out - ref)))
    print("KERNEL_OK")
</pallas_src>

<mosaic_0001>
module attributes {stable_mosaic.version = 11 : i64} {
  func.func @_eca_kernel(%arg0: i32, %arg1: i32, %arg2: memref<3xf32, #tpu.memory_space<smem>>, %arg3: memref<1x16x256xf32, #tpu.memory_space<vmem>>, %arg4: memref<1x1x16xf32, #tpu.memory_space<vmem>>, %arg5: memref<1x16x128xf32, #tpu.memory_space<vmem>>) attributes {dimension_semantics = [#tpu.dimension_semantics<parallel>, #tpu.dimension_semantics<arbitrary>], iteration_bounds = array<i64: 2, 1>, scalar_prefetch = 0 : i64, scratch_operands = 1 : i64, tpu.core_type = #tpu.core_type<tc>, window_params = [{transform_indices = @transform_0, window_bounds = array<i64: 3>}, {transform_indices = @transform_1, window_bounds = array<i64: 1, 16, 256>}, {transform_indices = @transform_2, window_bounds = array<i64: 1, 1, 16>}]} {
    %c0_i32 = arith.constant 0 : i32
    %0 = arith.cmpi eq, %arg1, %c0_i32 : i32
    %1 = arith.extui %0 : i1 to i32
    %c0_i32_0 = arith.constant 0 : i32
    %2 = arith.cmpi ne, %1, %c0_i32_0 : i32
    scf.if %2 {
      %cst = arith.constant 0.000000e+00 : f32
      %13 = vector.broadcast %cst : f32 to vector<1x16x128xf32>
      %c0_11 = arith.constant 0 : index
      %c0_12 = arith.constant 0 : index
      %c0_13 = arith.constant 0 : index
      %14 = vector.load %arg5[%c0_11, %c0_12, %c0_13] : memref<1x16x128xf32, #tpu.memory_space<vmem>>, vector<1x16x128xf32>
      tpu.vector_store %arg5[%c0_11, %c0_12, %c0_13], %13 {strides = array<i32>} : memref<1x16x128xf32, #tpu.memory_space<vmem>>, vector<1x16x128xf32>,
    } else {
    }
    %c0 = arith.constant 0 : index
    %c0_1 = arith.constant 0 : index
    %c0_2 = arith.constant 0 : index
    %3 = vector.load %arg3[%c0, %c0_1, %c0_2] : memref<1x16x256xf32, #tpu.memory_space<vmem>>, vector<1x16x256xf32>
    %c0_3 = arith.constant 0 : index
    %c0_4 = arith.constant 0 : index
    %c0_5 = arith.constant 0 : index
    %4 = vector.load %arg5[%c0_3, %c0_4, %c0_5] : memref<1x16x128xf32, #tpu.memory_space<vmem>>, vector<1x16x128xf32>
    %5 = vector.extract_strided_slice %3 {offsets = [0, 0, 0], sizes = [1, 16, 128], strides = [1, 1, 1]} : vector<1x16x256xf32> to vector<1x16x128xf32>
    %6 = arith.addf %4, %5 : vector<1x16x128xf32>
    %7 = vector.extract_strided_slice %3 {offsets = [0, 0, 128], sizes = [1, 16, 128], strides = [1, 1, 1]} : vector<1x16x256xf32> to vector<1x16x128xf32>
    %8 = arith.addf %6, %7 : vector<1x16x128xf32>
    %c0_6 = arith.constant 0 : index
    %c0_7 = arith.constant 0 : index
    %c0_8 = arith.constant 0 : index
    %9 = vector.load %arg5[%c0_6, %c0_7, %c0_8] : memref<1x16x128xf32, #tpu.memory_space<vmem>>, vector<1x16x128xf32>
    tpu.vector_store %arg5[%c0_6, %c0_7, %c0_8], %8 {strides = array<i32>} : memref<1x16x128xf32, #tpu.memory_space<vmem>>, vector<1x16x128xf32>,
    %c0_i32_9 = arith.constant 0 : i32
    %10 = arith.cmpi eq, %arg1, %c0_i32_9 : i32
    %11 = arith.extui %10 : i1 to i32
    %c0_i32_10 = arith.constant 0 : i32
    %12 = arith.cmpi ne, %11, %c0_i32_10 : i32
    scf.if %12 {
      %c0_11 = arith.constant 0 : index
      %c0_12 = arith.constant 0 : index
      %c0_13 = arith.constant 0 : index
      %13 = vector.load %arg5[%c0_11, %c0_12, %c0_13] : memref<1x16x128xf32, #tpu.memory_space<vmem>>, vector<1x16x128xf32>
      %cst = arith.constant dense<0.000000e+00> : vector<1x16xf32>
      %14 = vector.multi_reduction <add>, %13, %cst [2] : vector<1x16x128xf32> to vector<1x16xf32>
      %15 = tpu.iota {dimensions = array<i32: 1>} : vector<1x16xi32>
      %cst_14 = arith.constant 0.000000e+00 : f32
      %16 = vector.broadcast %cst_14 : f32 to vector<1x16xf32>
      %c1_i32 = arith.constant 1 : i32
      %17 = tpu.dynamic_rotate %14 by %c1_i32 dim 1 : vector<1x16xf32>, i32 -> vector<1x16xf32>
      %c1_i32_15 = arith.constant 1 : i32
      %18 = vector.broadcast %c1_i32_15 : i32 to vector<1x16xi32>
      %19 = arith.cmpi sge, %15, %18 : vector<1x16xi32>
      %cst_16 = arith.constant 0.000000e+00 : f32
      %20 = vector.broadcast %cst_16 : f32 to vector<1x16xf32>
      %21 = arith.select %19, %17, %20 : vector<1x16xi1>, vector<1x16xf32>
      %c0_17 = arith.constant 0 : index
      %22 = memref.load %arg2[%c0_17] : memref<3xf32, #tpu.memory_space<smem>>
      %23 = vector.broadcast %22 : f32 to vector<1x16xf32>
      %24 = arith.mulf %23, %21 : vector<1x16xf32>
      %25 = arith.addf %16, %24 : vector<1x16xf32>
      %c1 = arith.constant 1 : index
      %26 = memref.load %arg2[%c1] : memref<3xf32, #tpu.memory_space<smem>>
      %27 = vector.broadcast %26 : f32 to vector<1x16xf32>
      %28 = arith.mulf %27, %14 : vector<1x16xf32>
      %29 = arith.addf %25, %28 : vector<1x16xf32>
      %c15_i32 = arith.constant 15 : i32
      %30 = tpu.dynamic_rotate %14 by %c15_i32 dim 1 : vector<1x16xf32>, i32 -> vector<1x16xf32>
      %c15_i32_18 = arith.constant 15 : i32
      %31 = vector.broadcast %c15_i32_18 : i32 to vector<1x16xi32>
      %32 = arith.cmpi slt, %15, %31 : vector<1x16xi32>
      %cst_19 = arith.constant 0.000000e+00 : f32
      %33 = vector.broadcast %cst_19 : f32 to vector<1x16xf32>
      %34 = arith.select %32, %30, %33 : vector<1x16xi1>, vector<1x16xf32>
      %c2 = arith.constant 2 : index
      %35 = memref.load %arg2[%c2] : memref<3xf32, #tpu.memory_space<smem>>
      %36 = vector.broadcast %35 : f32 to vector<1x16xf32>
      %37 = arith.mulf %36, %34 : vector<1x16xf32>
      %38 = arith.addf %29, %37 : vector<1x16xf32>
      %39 = arith.negf %38 : vector<1x16xf32>
      %40 = math.exp %39 : vector<1x16xf32>
      %cst_20 = arith.constant 1.000000e+00 : f32
      %41 = vector.broadcast %cst_20 : f32 to vector<1x16xf32>
      %42 = arith.addf %41, %40 : vector<1x16xf32>
      %43 = arith.divf %41, %42 : vector<1x16xf32>
      %44 = vector.shape_cast %43 : vector<1x16xf32> to vector<1x1x16xf32>
      %c0_21 = arith.constant 0 : index
      %c0_22 = arith.constant 0 : index
      %c0_23 = arith.constant 0 : index
      %45 = vector.load %arg4[%c0_21, %c0_22, %c0_23] : memref<1x1x16xf32, #tpu.memory_space<vmem>>, vector<1x1x16xf32>
      tpu.vector_store %arg4[%c0_21, %c0_22, %c0_23], %44 {strides = array<i32>} : memref<1x1x16xf32, #tpu.memory_space<vmem>>, vector<1x1x16xf32>,
    } else {
    }
    return
  }
  func.func @transform_0(%arg0: i32, %arg1: i32) -> i32 {
    %c0_i32 = arith.constant 0 : i32
    %c0_i32_0 = arith.constant 0 : i32
    return %c0_i32 : i32
  }
  func.func @transform_1(%arg0: i32, %arg1: i32) -> (i32, i32, i32) {
    %c0_i32 = arith.constant 0 : i32
    %c0_i32_0 = arith.constant 0 : i32
    return %arg0, %c0_i32, %arg1 : i32, i32, i32
  }
  func.func @transform_2(%arg0: i32, %arg1: i32) -> (i32, i32, i32) {
    %c0_i32 = arith.constant 0 : i32
    %c0_i32_0 = arith.constant 0 : i32
    %c0_i32_1 = arith.constant 0 : i32
    return %arg0, %c0_i32, %c0_i32_0 : i32, i32, i32
  }
}

</mosaic_0001>

<llo_original>
// kernel: tpu_custom_call.1
$region0: #{tpu_custom_call.1}
  #allocation0 [shape = 'u32[]', space=smem, size = 0x4, offset = 0x4, fixed_abs, tag = 'smem constant byte address 0x4 - core index']
  #allocation1 [shape = 'u32[144,128]{1,0:T(1,128)}', space=vmem, size = 0x12000, scoped, tag = 'internal scratch']
  #allocation2 [shape = 'f32[1,16,128]{2,1,0:T(8,128)}', space=vmem, size = 0x2000, scoped, tag = 'scratch operand']
  %s0 = inlined_call_operand.hbm [shape: f32[3], index: 0, kind: input, shape index: {}]
  %s1 = inlined_call_operand.hbm [shape: f32[2,16,256], index: 1, kind: input, shape index: {}]
  %s2 = inlined_call_operand.hbm [shape: f32[2,1,16], index: 2, kind: output, shape index: {}]
  %s3 = sld [smem:[#allocation0]]
  $region57: #{tpu_custom_call.1} parent=0
    _
  %s5 = ssub.s32 1, %s3
  %s6 = scalar_select 0, %s5, %s3
  $region1: #{tpu_custom_call.1} parent=0
    #allocation3 [shape = 'u8[512]{0}', space=smem, size = 0x200, scoped, tag = 'input window, operand 0, single buffered']
    #allocation4 [shape = 's32[2]{0}', space=sflag, size = 0x8, scoped, tag = 'scoped memory for tpu_custom_call.1']
    #allocation5 [shape = 's32[2]{0}', space=sflag, size = 0x8, scoped, tag = 'scoped memory for tpu_custom_call.1']
    #allocation6 [shape = 's32[2]{0}', space=sflag, size = 0x8, scoped, tag = 'scoped memory for tpu_custom_call.1']
    #allocation7 [shape = 'u8[32768]{0}', space=vmem, size = 0x8000, scoped, tag = 'input window, operand 1']
    #allocation8 [shape = 'u8[1024]{0}', space=vmem, size = 0x400, scoped, tag = 'output window, operand 0']
    %7 = vsyncpa [#allocation6], 0
    %8 = vsyncpa [#allocation4], 0
    %s9 = scalar_lea.sflag [#allocation4], 1
    %10 = vsyncpa %s9, 0
    %11 = vsyncpa [#allocation5], 0
    %s12 = scalar_lea.sflag [#allocation5], 1
    %13 = vsyncpa %s12, 0
    loop: start=0, step=1, limit=4
    $region2: #{tpu_custom_call.1} parent=1 // loop_pre_header
      _
    $region3: #{tpu_custom_call.1} parent=1 // loop_header
      %s15 = sphi 0, %s19
      %p16 = scmp.ge.s32.totalorder %s15, 4
      %s22 = sphi 0, %s34
      %s23 = sphi 0, %s30
      %s24 = sphi 0, %s22
      %s25 = sphi 0, %s23
      %s26 = sphi 0, %s24
      %s27 = sphi 0, %s25
      %s35 = sphi 0, %s35
      %s37 = sphi 0, %s35
      %s38 = sphi 0, %s37
      %s52 = sphi 0, %s38
      %s60 = sphi 0, %s62
      %s63 = sphi 0, %s60
      %s64 = sphi 0, %s63
      %s80 = sphi 0, %s64
      %s86 = sphi 0, %s88
      %s89 = sphi 0, %s86
      %s90 = sphi 0, %s89
      %s106 = sphi 0, %s90
    $region4: #{tpu_custom_call.1} parent=1 // loop_header_branch
      %18 = sbr.rel (%p16) target = $region8
    $region5: #{tpu_custom_call.1} parent=1 // loop_body
      %s20 = ssub.s32 %s15, 1
      %s21 = ssub.s32 %s15, 2
      %s28 = sadd.s32 1, %s23
      %p29 = scmp.ge.s32.totalorder %s28, 1
      %s30 = scalar_select %p29, 0, %s28
      %s31 = sadd.s32 1, %s22
      %s32 = scalar_select %p29, %s31, %s22
      %p33 = scmp.ge.s32.totalorder %s32, 2
      %s34 = scalar_select %p33, 0, %s32
      %s36 = sadd.s32 %s35, 1
      %p39 = scmp.eq.s32.totalorder %s15, 1
      %p40 = scmp.ne.s32.totalorder %s35, %s37
      %p41 = scmp.eq.s32.totalorder %s15, 0
      %p42 = por %p40, %p41
      %p43 = scmp.ne.s32.totalorder %s35, %s37
      %p44 = scmp.eq.s32.totalorder %s20, 1
      %p45 = por %p43, %p44
      %p46 = scmp.ne.s32.totalorder %s37, %s38
      %p47 = scmp.eq.s32.totalorder %s20, 0
      %p48 = por %p46, %p47
      %p49 = scmp.ne.s32.totalorder %s37, %s38
      %p50 = scmp.eq.s32.totalorder %s21, 1
      %p51 = por %p49, %p50
      %p53 = scmp.ne.s32.totalorder %s38, %s52
      %p54 = scmp.eq.s32.totalorder %s21, 0
      %p55 = por %p53, %p54
      %s56 = ssub.s32 %s22, %s34
      %s57 = ssub.s32 %s23, %s30
      %s58 = sor.u32 %s56, %s57
      %p59 = scmp.eq.s32.totalorder %s58, 0
      %s61 = sadd.s32 %s60, 1
      %s62 = scalar_select %p59, %s60, %s61
      %p65 = pneg %p59
      %p66 = scmp.eq.s32.totalorder %s15, 1
      %p67 = por %p65, %p66
      %p68 = scmp.ne.s32.totalorder %s60, %s63
      %p69 = scmp.eq.s32.totalorder %s15, 0
      %p70 = por %p68, %p69
      %p71 = scmp.ne.s32.totalorder %s60, %s63
      %p72 = scmp.eq.s32.totalorder %s20, 1
      %p73 = por %p71, %p72
      %p74 = scmp.ne.s32.totalorder %s63, %s64
      %p75 = scmp.eq.s32.totalorder %s20, 0
      %p76 = por %p74, %p75
      %p77 = scmp.ne.s32.totalorder %s63, %s64
      %p78 = scmp.eq.s32.totalorder %s21, 1
      %p79 = por %p77, %p78
      %p81 = scmp.ne.s32.totalorder %s64, %s80
      %p82 = scmp.eq.s32.totalorder %s21, 0
      %p83 = por %p81, %p82
      %s84 = ssub.s32 %s22, %s34
      %p85 = scmp.eq.s32.totalorder %s84, 0
      %s87 = sadd.s32 %s86, 1
      %s88 = scalar_select %p85, %s86, %s87
      %p91 = pneg %p85
      %p92 = scmp.eq.s32.totalorder %s15, 1
      %p93 = por %p91, %p92
      %p94 = scmp.ne.s32.totalorder %s86, %s89
      %p95 = scmp.eq.s32.totalorder %s15, 0
      %p96 = por %p94, %p95
      %p97 = scmp.ne.s32.totalorder %s86, %s89
      %p98 = scmp.eq.s32.totalorder %s20, 1
      %p99 = por %p97, %p98
      %p100 = scmp.ne.s32.totalorder %s89, %s90
      %p101 = scmp.eq.s32.totalorder %s20, 0
      %p102 = por %p100, %p101
      %p103 = scmp.ne.s32.totalorder %s89, %s90
      %p104 = scmp.eq.s32.totalorder %s21, 1
      %p105 = por %p103, %p104
      %p107 = scmp.ne.s32.totalorder %s90, %s106
      %p108 = scmp.eq.s32.totalorder %s21, 0
      %p109 = por %p107, %p108
      %p110 = scmp.le.s32.totalorder 1, %s15
      %p111 = scmp.lt.s32.totalorder %s15, 3
      %p112 = pnand %p110, %p111
      %p113 = pneg %p112
      // Predicated region
      $region9: #{tpu_custom_call.1} parent=5 // pred_check
        _
      $region10: #{tpu_custom_call.1} parent=5 // pred_check_branch
        %115 = sbr.rel (%p112) target = $region12
      $region11: #{tpu_custom_call.1} parent=5 // pred_region
        %s116 = ssub.s32 %s15, 1
        // Predicated region
        $region13: #{tpu_custom_call.1} parent=11 // pred_check
          %p117 = pneg %p48
        $region14: #{tpu_custom_call.1} parent=11 // pred_check_branch
          %119 = sbr.rel (%p117) target = $region16
        $region15: #{tpu_custom_call.1} parent=11 // pred_region
          %s121 = ssub.s32 16, 16
          %122 = vsyncadd [#allocation6], %s121
          %125 = dma.hbm_to_smem %s0, 16, [#allocation3], [#allocation6]
        $region16: #{tpu_custom_call.1} parent=11 // pred_fallthru
          _
      $region12: #{tpu_custom_call.1} parent=5 // pred_fallthru
        _
      %p126 = scmp.lt.s32.totalorder %s15, 2
      // Predicated region
      $region17: #{tpu_custom_call.1} parent=5 // pred_check
        %p127 = pneg %p126
      $region18: #{tpu_custom_call.1} parent=5 // pred_check_branch
        %129 = sbr.rel (%p127) target = $region20
      $region19: #{tpu_custom_call.1} parent=5 // pred_region
        // Predicated region
        $region21: #{tpu_custom_call.1} parent=19 // pred_check
          %p130 = pneg %p70
        $region22: #{tpu_custom_call.1} parent=19 // pred_check_branch
          %132 = sbr.rel (%p130) target = $region24
        $region23: #{tpu_custom_call.1} parent=19 // pred_region
          %s133 = sand.u32 %s60, 1
          %s134 = scalar_lea.sflag [#allocation4], %s133
          %s135 = sand.u32 %s60, 1
          %s136 = smul.addr %s135, 32
          %s137 = scalar_lea.vmem [#allocation7], %s136
          %s138 = smul.u32 2, %s23
          %s140 = ssub.s32 512, 512
          %141 = vsyncadd %s134, %s140
          %s142 = smul.addr %s22, 4
          %s143 = sadd.s32 %s138, %s142
          %s144 = smul.addr %s143, 128
          %s145 = scalar_lea.hbm %s1, %s144
          %s146 = sshll.u32 %s137, 4
          %s147 = int_to_ptr.vmem [resolvable:$true] %s146
          %152 = dma.hbm_to_vmem [thread:$0]  %s145, 512, %s147, %s134, 256, 256, 16
        $region24: #{tpu_custom_call.1} parent=19 // pred_fallthru
          _
      $region20: #{tpu_custom_call.1} parent=5 // pred_fallthru
        _
      %p153 = scmp.le.s32.totalorder 1, %s15
      %p154 = scmp.lt.s32.totalorder %s15, 3
      %p155 = pnand %p153, %p154
      %p156 = pneg %p155
      // Predicated region
      $region25: #{tpu_custom_call.1} parent=5 // pred_check
        _
      $region26: #{tpu_custom_call.1} parent=5 // pred_check_branch
        %158 = sbr.rel (%p155) target = $region28
      $region27: #{tpu_custom_call.1} parent=5 // pred_region
        %s159 = ssub.s32 %s15, 1
        // Predicated region
        $region29: #{tpu_custom_call.1} parent=27 // pred_check
          %p160 = pneg %p48
        $region30: #{tpu_custom_call.1} parent=27 // pred_check_branch
          %162 = sbr.rel (%p160) target = $region32
        $region31: #{tpu_custom_call.1} parent=27 // pred_region
          %163 = dma.done [#allocation6], 16
        $region32: #{tpu_custom_call.1} parent=27 // pred_fallthru
          _
        %s164 = sand.u32 %s63, 1
        %s165 = scalar_lea.sflag [#allocation4], %s164
        %s166 = sand.u32 %s63, 1
        %s167 = smul.addr %s166, 32
        %s168 = scalar_lea.vmem [#allocation7], %s167
        // Predicated region
        $region33: #{tpu_custom_call.1} parent=27 // pred_check
          %p169 = pneg %p76
        $region34: #{tpu_custom_call.1} parent=27 // pred_check_branch
          %171 = sbr.rel (%p169) target = $region36
        $region35: #{tpu_custom_call.1} parent=27 // pred_region
          %172 = dma.done %s165, 512
        $region36: #{tpu_custom_call.1} parent=27 // pred_fallthru
          _
        %173 = sfence
        %p174 = pneg %p48
        %p175 = pneg %p45
        %s176 = sand.u32 %s63, 1
        %s177 = scalar_lea.sflag [#allocation4], %s176
        %s178 = sand.u32 %s63, 1
        %s179 = smul.addr %s178, 32
        %s180 = scalar_lea.vmem [#allocation7], %s179
        %p181 = pneg %p76
        %p182 = pneg %p73
        %p183 = pneg %p102
        %p184 = pneg %p99
        %s185 = sand.u32 %s89, 1
        %s186 = scalar_lea.sflag [#allocation5], %s185
        %s187 = sand.u32 %s89, 1
        %s188 = scalar_lea.vmem [#allocation8], %s187
        %s189 = smul.u32 2, %s25
        %p190 = scmp.eq.s32.totalorder %s25, 0
        // Predicated region
        $region37: #{tpu_custom_call.1} parent=27 // pred_check
          %p191 = pneg %p190
        $region38: #{tpu_custom_call.1} parent=27 // pred_check_branch
          %193 = sbr.rel (%p191) target = $region40
        $region39: #{tpu_custom_call.1} parent=27 // pred_region
          %194 = vst [vmem:[#allocation2] sm:$0xff] 0.0
          %195 = vst [vmem:[#allocation2 + $0x8] sm:$0xff] 0.0
        $region40: #{tpu_custom_call.1} parent=27 // pred_fallthru
          _
        %v196 = vld [vmem:[%s168] sm:$0xff]
        %v197 = vld [vmem:[%s168 + $0x8] sm:$0xff]
        %v198 = vld [vmem:[%s168 + $0x10] sm:$0xff]
        %v199 = vld [vmem:[%s168 + $0x18] sm:$0xff]
        %v200 = vld [vmem:[#allocation2] sm:$0xff]
        %v201 = vld [vmem:[#allocation2 + $0x8] sm:$0xff]
        %v202 = vadd.f32 %v200, %v196
        %v203 = vadd.f32 %v201, %v198
        %v204 = vadd.f32 %v202, %v197
        %v205 = vadd.f32 %v203, %v199
        %206 = vst [vmem:[#allocation2] sm:$0xff] %v204
        %207 = vst [vmem:[#allocation2 + $0x8] sm:$0xff] %v205
        // Predicated region
        $region41: #{tpu_custom_call.1} parent=27 // pred_check
          %p208 = pneg %p190
        $region42: #{tpu_custom_call.1} parent=27 // pred_check_branch
          %210 = sbr.rel (%p208) target = $region44
        $region43: #{tpu_custom_call.1} parent=27 // pred_region
          %v211 = vld [vmem:[#allocation2] sm:$0xff]
          %v212 = vld [vmem:[#allocation2 + $0x8] sm:$0xff]
          %213 = vadd.xlane.f32.xlu0 %v211
          %v214 = vpop.xlane.xlu0 %213
          %215 = vadd.xlane.f32.xlu0 %v212
          %v216 = vpop.xlane.xlu0 %215
          %v217 = vlaneseq
          %v218 = vand.u32 %v217, 127
          %v221 = vlaneseq
          %v222 = vshrl.u32 %v221, 7
          %v223 = vsub.s32 %v218, %v222
          %v224 = vrot.slane %v214, %v223
          %v225 = vadd.s32 %v218, 4294967288
          %v226 = vlaneseq
          %v227 = vshrl.u32 %v226, 7
          %v228 = vsub.s32 %v225, %v227
          %v229 = vrot.slane %v216, %v228
          %vm230 = vcmask 130112
          %v231 = vsel %vm230, %v229, %v224
          %vm233 = vcmask 1047680
          %234 = vrot.lane.b32.xlu0 %v231, 16
          %v235 = vpop.permute.xlu0 %234
          %v236 = vsel %vm233, %v235, %v231
          %237 = vrot.lane.b32.xlu0 %v236, 16
          %v238 = vpop.permute.xlu0 %237
          %v239 = vsel %vm233, %v238, %v231
          %vm240 = vcmp.ge.s32.totalorder %v218, 1
          %242 = vrot.lane.b32.xlu0 %v239, 113
          %v243 = vpop.permute.xlu0 %242
          %v245 = vsel %vm240, %v243, 0.0
          %s246 = sld [smem:[#allocation3]]
          %v247 = vstv %s246
          %v248 = vmul.f32 %v247, %v245
          %v249 = vadd.f32 %v248, 0.0
          %s250 = sld [smem:[#allocation3 + $0x1]]
          %v251 = vstv %s250
          %v252 = vmul.f32 %v251, %v214
          %v253 = vmul.f32 %v251, %v216
          %v256 = vlaneseq
          %v257 = vshrl.u32 %v256, 7
          %v258 = vsub.s32 %v218, %v257
          %v259 = vrot.slane %v252, %v258
          %v260 = vlaneseq
          %v261 = vshrl.u32 %v260, 7
          %v262 = vsub.s32 %v225, %v261
          %v263 = vrot.slane %v253, %v262
          %v264 = vsel %vm230, %v263, %v259
          %v266 = vadd.f32 %v249, %v264
          %vm267 = vcmp.lt.s32.totalorder %v218, 15
          %268 = vrot.lane.b32.xlu0 %v239, 127
          %v269 = vpop.permute.xlu0 %268
          %v271 = vsel %vm267, %v269, 0.0
          %s272 = sld [smem:[#allocation3 + $0x2]]
          %v273 = vstv %s272
          %v274 = vmul.f32 %v273, %v271
          %v275 = vadd.f32 %v266, %v274
          %v276 = vxor.u32 %v275, 2147483648
          %v277 = vmul.f32 %v276, 1.442695
          %v278 = vpow.pop %v277
          %v279 = vadd.f32 %v278, 1.0
          %v280 = vrcp.pop %v279
          %v281 = vmul.f32 1.0, %v280
          %vm282 = vcmask 122880
          %283 = vst.msk [vmem:[%s188] sm:$0x1] %vm282, %v281
        $region44: #{tpu_custom_call.1} parent=27 // pred_fallthru
          _
        %s284 = sand.u32 %s89, 1
        %s285 = scalar_lea.sflag [#allocation5], %s284
        %s286 = sand.u32 %s89, 1
        %s287 = scalar_lea.vmem [#allocation8], %s286
        // Predicated region
        $region45: #{tpu_custom_call.1} parent=27 // pred_check
          %p288 = pneg %p99
        $region46: #{tpu_custom_call.1} parent=27 // pred_check_branch
          %290 = sbr.rel (%p288) target = $region48
        $region47: #{tpu_custom_call.1} parent=27 // pred_region
          %s292 = ssub.s32 16, 16
          %293 = vsyncadd %s285, %s292
          %s294 = smul.addr %s24, 16
          %s295 = scalar_lea.hbm %s2, %s294
          %s297 = sshll.u32 %s287, 4
          %s298 = int_to_ptr.vmem [resolvable:$true] %s297
          %300 = dma.vmem_to_hbm [thread:$0]  %s298, 16, %s295, %s285
        $region48: #{tpu_custom_call.1} parent=27 // pred_fallthru
          _
      $region28: #{tpu_custom_call.1} parent=5 // pred_fallthru
        _
      %p301 = scmp.le.s32.totalorder 2, %s15
      // Predicated region
      $region49: #{tpu_custom_call.1} parent=5 // pred_check
        %p302 = pneg %p301
      $region50: #{tpu_custom_call.1} parent=5 // pred_check_branch
        %304 = sbr.rel (%p302) target = $region52
      $region51: #{tpu_custom_call.1} parent=5 // pred_region
        %s305 = ssub.s32 %s15, 2
        // Predicated region
        $region53: #{tpu_custom_call.1} parent=51 // pred_check
          %p306 = pneg %p105
        $region54: #{tpu_custom_call.1} parent=51 // pred_check_branch
          %308 = sbr.rel (%p306) target = $region56
        $region55: #{tpu_custom_call.1} parent=51 // pred_region
          %s309 = sand.u32 %s90, 1
          %s310 = scalar_lea.sflag [#allocation5], %s309
          %s311 = sand.u32 %s90, 1
          %s312 = scalar_lea.vmem [#allocation8], %s311
          %313 = dma.done %s310, 16
        $region56: #{tpu_custom_call.1} parent=51 // pred_fallthru
          _
      $region52: #{tpu_custom_call.1} parent=5 // pred_fallthru
        _
    $region6: #{tpu_custom_call.1} parent=1 // loop_footer
      %s19 = sadd.s32 1, %s15
    $region7: #{tpu_custom_call.1} parent=1 // loop_footer_branch
      %14 = sbr.rel target = $region3
    $region8: #{tpu_custom_call.1} parent=1 // loop_exit
      _
    %314 = vsyncpa [#allocation4], 1
    %s315 = scalar_lea.sflag [#allocation4], 1
    %316 = vsyncpa %s315, 1
    %317 = vsyncpa [#allocation5], 1
    %s318 = scalar_lea.sflag [#allocation5], 1
    %319 = vsyncpa %s318, 1
    %320 = vsyncpa [#allocation6], 1
    %s321 = scalar_lea.sflag [#allocation6], 1
    %322 = vsyncpa %s321, 1

</llo_original>
